<compile_context>
chip_gen: v6e
topology: v6e:2x2x1
jax: 0.10.0
libtpu: 0.0.40
codegen_flags: <defaults>
</compile_context>

<pallas_src>
import functools

import jax
import jax.numpy as jnp
from jax import lax
from jax.experimental import pallas as pl
from jax.experimental.pallas import tpu as pltpu

SCALE_FACTOR = 0.18215  # SD first-stage scaling
C_LAT = 4               # true latent channels of the stand-in encoder
C_PAD = 128             # lane-dense padded latent width (zero columns beyond C_LAT)
K_PAD = 32              # padded patch width (27 im2col features + zero columns)


# ----------------------------- Pallas kernel -----------------------------

def fused_forward_kernel(patches_ref, wcat_ref, bias_ref, eps_ref, out_ref,
                         *, m_rows, inv_sem_n):
    # Single MXU pass for BOTH images and BOTH matmuls:
    #   acts[:, :C_PAD]  = latent z   (encoder, scale+bias folded)
    #   acts[:, C_PAD:]  = eps_pred   (encoder @ wz precomposed, + bias row
    #                                  carrying b_enc*scale@wz + cond@wc)
    acts = jnp.dot(patches_ref[...], wcat_ref[...],
                   preferred_element_type=jnp.float32) + bias_ref[...]

    zx = acts[:m_rows, :C_PAD]
    zy = acts[m_rows:, :C_PAD]
    d = zx - zy
    mse = jnp.sum(d * d)                     # nn.MSELoss(reduction='sum')(zx, zy)

    # TODO(synk): real SDM semantic loss runs a UNet; linear denoiser stand-in.
    r = acts[:m_rows, C_PAD:] - eps_ref[...]
    sem = jnp.sum(r * r) * inv_sem_n         # mean over the TRUE (M, C_LAT) extent

    # Single lane-indexed (1, 2) store: lane 0 = mse_sum, lane 1 = semantic loss.
    lane = lax.broadcasted_iota(jnp.int32, (1, 2), 1)
    out_ref[...] = jnp.where(lane == 0, mse, sem)


# ----------------------------- glue (plain JAX) -----------------------------

def extract_patches(x_nchw):
    """3x3 / stride-2 / pad-1 patch extraction -> (B*Ho*Wo, 9*C). One HLO op."""
    p = lax.conv_general_dilated_patches(
        x_nchw.astype(jnp.float32), filter_shape=(3, 3),
        window_strides=(2, 2), padding=((1, 1), (1, 1)))
    B, K, Ho, Wo = p.shape                       # (B, 9*C, Ho, Wo)
    return jnp.transpose(p, (0, 2, 3, 1)).reshape(B * Ho * Wo, K)


def build_padded_constants(params):
    """Hoisted out of the per-step path: fold scale/bias/wz/cond into padded,
    lane-dense constants that are reused unchanged across the attack loop."""
    k_raw = params["w_enc"].shape[0]
    w_enc_s = params["w_enc"] * SCALE_FACTOR                 # (K, C_LAT)
    b_enc_s = params["b_enc"] * SCALE_FACTOR                 # (1, C_LAT)
    wz = params["wz"]                                        # (C_LAT, C_LAT)
    cproj = jnp.dot(params["cond"], params["wc"])            # (1, C_LAT)

    # W_cat = [encoder | encoder @ wz]  (single MXU pass in the kernel).
    w_cat = jnp.zeros((K_PAD, 2 * C_PAD), jnp.float32)
    w_cat = w_cat.at[:k_raw, :C_LAT].set(w_enc_s)
    w_cat = w_cat.at[:k_raw, C_PAD:C_PAD + C_LAT].set(jnp.dot(w_enc_s, wz))

    # bias row: latent half gets b_enc*scale; eps half gets b_enc*scale@wz + cproj.
    bias = jnp.zeros((1, 2 * C_PAD), jnp.float32)
    bias = bias.at[:, :C_LAT].set(b_enc_s)
    bias = bias.at[:, C_PAD:C_PAD + C_LAT].set(jnp.dot(b_enc_s, wz) + cproj)

    m_rows = params["eps"].shape[0]
    eps = jnp.zeros((m_rows, C_PAD), jnp.float32)
    eps = eps.at[:, :C_LAT].set(params["eps"])

    consts = {"w_cat": w_cat, "bias": bias, "eps": eps}

    # Zero padding beyond the true extents is load-bearing for both losses
    # (review concern) -- cheap one-time checks at build time.
    assert bool(jnp.all(consts["w_cat"][k_raw:, :] == 0.0))
    assert bool(jnp.all(consts["w_cat"][:, C_LAT:C_PAD] == 0.0))
    assert bool(jnp.all(consts["w_cat"][:, C_PAD + C_LAT:] == 0.0))
    assert bool(jnp.all(consts["bias"][:, C_LAT:C_PAD] == 0.0))
    assert bool(jnp.all(consts["bias"][:, C_PAD + C_LAT:] == 0.0))
    assert bool(jnp.all(consts["eps"][:, C_LAT:] == 0.0))
    return consts


@jax.jit
def fused_losses(x_nchw, y_nchw, consts):
    """One no-grid Pallas call -> (mse_sum(zx, zy), semantic_loss(zx))."""
    # Stack x and target along batch so ONE patch-extraction op and ONE pad
    # feed the kernel; first M rows belong to x, last M rows to the target.
    xy = jnp.concatenate([x_nchw, y_nchw], axis=0)
    patches = extract_patches(xy)                            # (2M, 27)
    n2, k_raw = patches.shape
    m_rows = n2 // 2
    patches = jnp.pad(patches, ((0, 0), (0, K_PAD - k_raw)))  # (2M, K_PAD)

    kernel = functools.partial(fused_forward_kernel,
                               m_rows=m_rows,
                               inv_sem_n=1.0 / float(m_rows * C_LAT))

    # No grid: single invocation, whole arrays resident in VMEM (<0.5 MB),
    # no pipeline double-buffering overhead.  (If scaled to real SD latents,
    # add an M-tiled "parallel" grid axis and bf16 MXU inputs per review.)
    out = pl.pallas_call(
        kernel,
        out_shape=jax.ShapeDtypeStruct((1, 2), jnp.float32),
        in_specs=[pl.BlockSpec(memory_space=pltpu.MemorySpace.VMEM)] * 4,
        out_specs=pl.BlockSpec(memory_space=pltpu.MemorySpace.VMEM),
    )(patches, consts["w_cat"], consts["bias"], consts["eps"])
    return out[0, 0], out[0, 1]


def target_model_forward(x_nchw, target_info_nchw, consts,
                         mode="mist", rate=10000, g_mode="+", components=False):
    g_dir = 1.0 if g_mode == "+" else -1.0
    # Single fused kernel; the target-path semantic loss is unused in every
    # return path of the original module and is not computed at all.
    mse, loss_semantic = fused_losses(x_nchw, target_info_nchw, consts)
    if components:
        return mse, loss_semantic
    if mode == "advdm":
        return -loss_semantic * g_dir
    elif mode == "texture_only":
        return mse
    elif mode == "mist":
        return mse * g_dir - loss_semantic * rate
    elif mode == "texture_self_enhance":
        return -mse
    else:
        raise KeyError("mode not defined")


# ----------------------------- plain-JAX reference -----------------------------

def reference_losses(x_nchw, y_nchw, params):
    def encode(img):
        p = extract_patches(img)
        return (jnp.dot(p, params["w_enc"]) + params["b_enc"]) * SCALE_FACTOR
    zx = encode(x_nchw)
    zy = encode(y_nchw)
    mse = jnp.sum((zx - zy) ** 2)
    cproj = jnp.dot(params["cond"], params["wc"])
    eps_pred = jnp.dot(zx, params["wz"]) + cproj
    sem = jnp.mean((eps_pred - params["eps"]) ** 2)
    return mse, sem


# ----------------------------- main -----------------------------

if __name__ == "__main__":
    key = jax.random.PRNGKey(0)
    kx, ky, kw, kb, kwz, kwc, keps = jax.random.split(key, 7)

    # Small shapes: image (B=2, C_in=3, 16x16) NCHW -> latent rows M=128, C_lat=4
    B, C_in, H, W = 2, 3, 16, 16
    D = 32
    Hl, Wl = H // 2, W // 2
    M = B * Hl * Wl                       # 128 latent rows
    K = 3 * 3 * C_in                      # 27 patch features

    x = jax.random.normal(kx, (B, C_in, H, W), jnp.float32)
    target_info = jax.random.normal(ky, (B, C_in, H, W), jnp.float32)

    # Deterministic "condition" embedding derived from the condition string.
    condition = "a photo"
    cond_key = jax.random.fold_in(key, sum(ord(ch) for ch in condition))

    params = {
        "w_enc": 0.1 * jax.random.normal(kw, (K, C_LAT), jnp.float32),
        "b_enc": 0.05 * jax.random.normal(kb, (1, C_LAT), jnp.float32),
        "wz":    0.1 * jax.random.normal(kwz, (C_LAT, C_LAT), jnp.float32),
        "wc":    0.1 * jax.random.normal(kwc, (D, C_LAT), jnp.float32),
        "cond":  jax.random.normal(cond_key, (1, D), jnp.float32),
        "eps":   jax.random.normal(keps, (M, C_LAT), jnp.float32),
    }

    # Constant folding/padding done once, outside the per-step path.
    consts = build_padded_constants(params)

    loss = target_model_forward(x, target_info, consts,
                                mode="mist", rate=10000, g_mode="+")
    loss = jax.block_until_ready(loss)

    # Sanity check the fused kernel against the plain-JAX reference math.
    mse_k, sem_k = fused_losses(x, target_info, consts)
    mse_r, sem_r = reference_losses(x, target_info, params)
    ok = bool(jnp.allclose(mse_k, mse_r, rtol=1e-2, atol=1e-2)
              and jnp.allclose(sem_k, sem_r, rtol=1e-2, atol=1e-2))
    print("KERNEL_OK" if ok else "KERNEL_MISMATCH")
</pallas_src>

<mosaic_0001>
module attributes {stable_mosaic.version = 11 : i64} {
  func.func @fused_forward_kernel(%arg0: memref<256x32xf32, #tpu.memory_space<vmem>>, %arg1: memref<32x256xf32, #tpu.memory_space<vmem>>, %arg2: memref<1x256xf32, #tpu.memory_space<vmem>>, %arg3: memref<128x128xf32, #tpu.memory_space<vmem>>, %arg4: memref<1x2xf32, #tpu.memory_space<vmem>>) attributes {dimension_semantics = [], scalar_prefetch = 0 : i64, scratch_operands = 0 : i64, tpu.core_type = #tpu.core_type<tc>} {
    %c0 = arith.constant 0 : index
    %c0_0 = arith.constant 0 : index
    %0 = vector.load %arg0[%c0, %c0_0] : memref<256x32xf32, #tpu.memory_space<vmem>>, vector<256x32xf32>
    %c0_1 = arith.constant 0 : index
    %c0_2 = arith.constant 0 : index
    %1 = vector.load %arg1[%c0_1, %c0_2] : memref<32x256xf32, #tpu.memory_space<vmem>>, vector<32x256xf32>
    %cst = arith.constant dense<0.000000e+00> : vector<256x256xf32>
    %2 = tpu.matmul %0, %1, %cst {dimension_numbers = #tpu.dot_dimension_numbers<[1], [0], [0], [1], [0, 0, 1, 1], [], []>} : vector<256x32xf32>, vector<32x256xf32>, vector<256x256xf32> -> vector<256x256xf32>
    %c0_3 = arith.constant 0 : index
    %c0_4 = arith.constant 0 : index
    %3 = vector.load %arg2[%c0_3, %c0_4] : memref<1x256xf32, #tpu.memory_space<vmem>>, vector<1x256xf32>
    %4 = vector.broadcast %3 : vector<1x256xf32> to vector<256x256xf32>
    %5 = arith.addf %2, %4 : vector<256x256xf32>
    %6 = vector.extract_strided_slice %5 {offsets = [0, 0], sizes = [128, 128], strides = [1, 1]} : vector<256x256xf32> to vector<128x128xf32>
    %7 = vector.extract_strided_slice %5 {offsets = [128, 0], sizes = [128, 128], strides = [1, 1]} : vector<256x256xf32> to vector<128x128xf32>
    %8 = arith.subf %6, %7 : vector<128x128xf32>
    %9 = arith.mulf %8, %8 : vector<128x128xf32>
    %10 = vector.shape_cast %9 : vector<128x128xf32> to vector<1x128x128xf32>
    %cst_5 = arith.constant dense<0.000000e+00> : vector<1xf32>
    %11 = vector.multi_reduction <add>, %10, %cst_5 [1, 2] : vector<1x128x128xf32> to vector<1xf32>
    %12 = vector.shape_cast %11 : vector<1xf32> to vector<1x1x1xf32>
    %13 = vector.extract %12[0, 0, 0] : f32 from vector<1x1x1xf32>
    %14 = vector.extract_strided_slice %5 {offsets = [0, 128], sizes = [128, 128], strides = [1, 1]} : vector<256x256xf32> to vector<128x128xf32>
    %c0_6 = arith.constant 0 : index
    %c0_7 = arith.constant 0 : index
    %15 = vector.load %arg3[%c0_6, %c0_7] : memref<128x128xf32, #tpu.memory_space<vmem>>, vector<128x128xf32>
    %16 = arith.subf %14, %15 : vector<128x128xf32>
    %17 = arith.mulf %16, %16 : vector<128x128xf32>
    %18 = vector.shape_cast %17 : vector<128x128xf32> to vector<1x128x128xf32>
    %cst_8 = arith.constant dense<0.000000e+00> : vector<1xf32>
    %19 = vector.multi_reduction <add>, %18, %cst_8 [1, 2] : vector<1x128x128xf32> to vector<1xf32>
    %20 = vector.shape_cast %19 : vector<1xf32> to vector<1x1x1xf32>
    %21 = vector.extract %20[0, 0, 0] : f32 from vector<1x1x1xf32>
    %cst_9 = arith.constant 0.001953125 : f32
    %22 = arith.mulf %21, %cst_9 : f32
    %23 = tpu.iota {dimensions = array<i32: 1>} : vector<1x2xi32>
    %c0_i32 = arith.constant 0 : i32
    %24 = vector.broadcast %c0_i32 : i32 to vector<1x2xi32>
    %25 = arith.cmpi eq, %23, %24 : vector<1x2xi32>
    %26 = vector.broadcast %13 : f32 to vector<1x2xf32>
    %27 = vector.broadcast %22 : f32 to vector<1x2xf32>
    %28 = arith.select %25, %26, %27 : vector<1x2xi1>, vector<1x2xf32>
    %c0_10 = arith.constant 0 : index
    %c0_11 = arith.constant 0 : index
    %29 = vector.load %arg4[%c0_10, %c0_11] : memref<1x2xf32, #tpu.memory_space<vmem>>, vector<1x2xf32>
    tpu.vector_store %arg4[%c0_10, %c0_11], %28 {strides = array<i32>} : memref<1x2xf32, #tpu.memory_space<vmem>>, vector<1x2xf32>,
    return
  }
}

</mosaic_0001>

<llo_original>
// kernel: fused_losses.1
$region0: #{fused_losses.1}
  #allocation0 [shape = 'u32[]', space=smem, size = 0x4, offset = 0x4, fixed_abs, tag = 'smem constant byte address 0x4 - core index']
  #allocation1 [shape = 'u32[144,128]{1,0:T(1,128)}', space=vmem, size = 0x12000, scoped, tag = 'internal scratch']
  %s0 = inlined_call_operand.vmem [shape: f32[256,32], index: 0, kind: input, shape index: {}]
  %s1 = inlined_call_operand.vmem [shape: f32[32,256], index: 1, kind: input, shape index: {}]
  %s2 = inlined_call_operand.vmem [shape: f32[1,256], index: 2, kind: input, shape index: {}]
  %s3 = inlined_call_operand.vmem [shape: f32[128,128], index: 3, kind: input, shape index: {}]
  %s4 = inlined_call_operand.vmem [shape: f32[1,2], index: 4, kind: output, shape index: {}]
  %s5 = sld [smem:[#allocation0]]
  $region26: #{fused_losses.1} parent=0
    _
  %s7 = ssub.s32 1, %s5
  %s8 = scalar_select 0, %s7, %s5
  // Predicated region
  $region2: #{fused_losses.1} parent=0 // pred_check
    _
  $region3: #{fused_losses.1} parent=0 // pred_check_branch
    %10 = sbr.rel (0) target = $region5
  $region4: #{fused_losses.1} parent=0 // pred_region
    _
  $region5: #{fused_losses.1} parent=0 // pred_fallthru
    _
  // Predicated region
  $region6: #{fused_losses.1} parent=0 // pred_check
    _
  $region7: #{fused_losses.1} parent=0 // pred_check_branch
    %12 = sbr.rel (0) target = $region9
  $region8: #{fused_losses.1} parent=0 // pred_region
    _
  $region9: #{fused_losses.1} parent=0 // pred_fallthru
    _
  // Predicated region
  $region10: #{fused_losses.1} parent=0 // pred_check
    _
  $region11: #{fused_losses.1} parent=0 // pred_check_branch
    %14 = sbr.rel (0) target = $region13
  $region12: #{fused_losses.1} parent=0 // pred_region
    _
  $region13: #{fused_losses.1} parent=0 // pred_fallthru
    _
  // Predicated region
  $region14: #{fused_losses.1} parent=0 // pred_check
    _
  $region15: #{fused_losses.1} parent=0 // pred_check_branch
    %16 = sbr.rel (0) target = $region17
  $region16: #{fused_losses.1} parent=0 // pred_region
    _
  $region17: #{fused_losses.1} parent=0 // pred_fallthru
    _
  %v17 = vld [vmem:[%s0] sm:$0xff]
  %v18 = vld [vmem:[%s0 + $0x8] sm:$0xff]
  %v19 = vld [vmem:[%s0 + $0x10] sm:$0xff]
  %v20 = vld [vmem:[%s0 + $0x18] sm:$0xff]
  %v21 = vld [vmem:[%s0 + $0x20] sm:$0xff]
  %v22 = vld [vmem:[%s0 + $0x28] sm:$0xff]
  %v23 = vld [vmem:[%s0 + $0x30] sm:$0xff]
  %v24 = vld [vmem:[%s0 + $0x38] sm:$0xff]
  %v25 = vld [vmem:[%s0 + $0x40] sm:$0xff]
  %v26 = vld [vmem:[%s0 + $0x48] sm:$0xff]
  %v27 = vld [vmem:[%s0 + $0x50] sm:$0xff]
  %v28 = vld [vmem:[%s0 + $0x58] sm:$0xff]
  %v29 = vld [vmem:[%s0 + $0x60] sm:$0xff]
  %v30 = vld [vmem:[%s0 + $0x68] sm:$0xff]
  %v31 = vld [vmem:[%s0 + $0x70] sm:$0xff]
  %v32 = vld [vmem:[%s0 + $0x78] sm:$0xff]
  %v33 = vld [vmem:[%s0 + $0x80] sm:$0xff]
  %v34 = vld [vmem:[%s0 + $0x88] sm:$0xff]
  %v35 = vld [vmem:[%s0 + $0x90] sm:$0xff]
  %v36 = vld [vmem:[%s0 + $0x98] sm:$0xff]
  %v37 = vld [vmem:[%s0 + $0xa0] sm:$0xff]
  %v38 = vld [vmem:[%s0 + $0xa8] sm:$0xff]
  %v39 = vld [vmem:[%s0 + $0xb0] sm:$0xff]
  %v40 = vld [vmem:[%s0 + $0xb8] sm:$0xff]
  %v41 = vld [vmem:[%s0 + $0xc0] sm:$0xff]
  %v42 = vld [vmem:[%s0 + $0xc8] sm:$0xff]
  %v43 = vld [vmem:[%s0 + $0xd0] sm:$0xff]
  %v44 = vld [vmem:[%s0 + $0xd8] sm:$0xff]
  %v45 = vld [vmem:[%s0 + $0xe0] sm:$0xff]
  %v46 = vld [vmem:[%s0 + $0xe8] sm:$0xff]
  %v47 = vld [vmem:[%s0 + $0xf0] sm:$0xff]
  %v48 = vld [vmem:[%s0 + $0xf8] sm:$0xff]
  %v49 = vld [vmem:[%s1] sm:$0xff]
  %v50 = vld [vmem:[%s1 + $0x8] sm:$0xff]
  %v51 = vld [vmem:[%s1 + $0x10] sm:$0xff]
  %v52 = vld [vmem:[%s1 + $0x18] sm:$0xff]
  %v53 = vld [vmem:[%s1 + $0x20] sm:$0xff]
  %v54 = vld [vmem:[%s1 + $0x28] sm:$0xff]
  %v55 = vld [vmem:[%s1 + $0x30] sm:$0xff]
  %v56 = vld [vmem:[%s1 + $0x38] sm:$0xff]
  %v57 = vld [vmem:[%s2] sm:$0x3]
  %v59 = vlaneseq
  %v60 = vshrl.u32 %v59, 7
  %v61 = vsub.s32 0, %v60
  %v62 = vrot.slane %v57, %v61
  %v63 = vlaneseq
  %v64 = vshrl.u32 %v63, 7
  %v65 = vsub.s32 1, %v64
  %v66 = vrot.slane %v57, %v65
  %vm69 = vcmask 261120
  %v71 = vsel %vm69, %v17, 0
  %v74 = vsel %vm69, %v18, 0
  %v77 = vsel %vm69, %v19, 0
  %v80 = vsel %vm69, %v20, 0
  %v83 = vsel %vm69, %v21, 0
  %v86 = vsel %vm69, %v22, 0
  %v89 = vsel %vm69, %v23, 0
  %v92 = vsel %vm69, %v24, 0
  %v95 = vsel %vm69, %v25, 0
  %v98 = vsel %vm69, %v26, 0
  %v101 = vsel %vm69, %v27, 0
  %v104 = vsel %vm69, %v28, 0
  %v107 = vsel %vm69, %v29, 0
  %v110 = vsel %vm69, %v30, 0
  %v113 = vsel %vm69, %v31, 0
  %v116 = vsel %vm69, %v32, 0
  %v119 = vsel %vm69, %v33, 0
  %v122 = vsel %vm69, %v34, 0
  %v125 = vsel %vm69, %v35, 0
  %v128 = vsel %vm69, %v36, 0
  %v131 = vsel %vm69, %v37, 0
  %v134 = vsel %vm69, %v38, 0
  %v137 = vsel %vm69, %v39, 0
  %v140 = vsel %vm69, %v40, 0
  %v143 = vsel %vm69, %v41, 0
  %v146 = vsel %vm69, %v42, 0
  %v149 = vsel %vm69, %v43, 0
  %v152 = vsel %vm69, %v44, 0
  %v155 = vsel %vm69, %v45, 0
  %v158 = vsel %vm69, %v46, 0
  %v161 = vsel %vm69, %v47, 0
  %v164 = vsel %vm69, %v48, 0
  %166 = vmatprep.subr.mxu0 0.0
  %167 = vmatpush1.msra.mxu0 0.0
  %168 = vmatprep.subr.mxu0 0.0
  %169 = vmatpush1.msra.mxu0 0.0
  %170 = vmatprep.subr.mxu0 0.0
  %171 = vmatpush1.msra.mxu0 0.0
  %172 = vmatprep.subr.mxu0 0.0
  %173 = vmatpush1.msra.mxu0 0.0
  %174 = vmatprep.subr.mxu0 0.0
  %175 = vmatpush1.msra.mxu0 0.0
  %176 = vmatprep.subr.mxu0 0.0
  %177 = vmatpush1.msra.mxu0 0.0
  %178 = vmatprep.subr.mxu0 0.0
  %179 = vmatpush1.msra.mxu0 0.0
  %180 = vmatprep.subr.mxu0 0.0
  %181 = vmatpush1.msra.mxu0 0.0
  %182 = vmatprep.subr.mxu0 0.0
  %183 = vmatpush1.msra.mxu0 0.0
  %184 = vmatprep.subr.mxu0 0.0
  %185 = vmatpush1.msra.mxu0 0.0
  %186 = vmatprep.subr.mxu0 0.0
  %187 = vmatpush1.msra.mxu0 0.0
  %188 = vmatprep.subr.mxu0 0.0
  %189 = vmatpush1.msra.mxu0 0.0
  %190 = vmatprep.subr.mxu0 %v56
  %191 = vmatpush1.msra.mxu0 %v55
  %192 = vmatprep.subr.mxu0 %v54
  %193 = vmatpush1.msra.mxu0 %v53
  %194 = vmatprep.subr.mxu0 %v52
  %195 = vmatpush1.msra.mxu0 %v51
  %196 = vmatprep.subr.mxu0 %v50
  %197 = vmatpush1.msra.mxu0 %v49
  %198 = vmatprep.subr.mxu0 0.0
  %199 = vmatpush2.msra.mxu0 0.0
  %200 = vmatprep.subr.mxu0 0.0
  %201 = vmatpush2.msra.mxu0 0.0
  %202 = vmatprep.subr.mxu0 0.0
  %203 = vmatpush2.msra.mxu0 0.0
  %204 = vmatprep.subr.mxu0 0.0
  %205 = vmatpush2.msra.mxu0 0.0
  %206 = vmatprep.subr.mxu0 0.0
  %207 = vmatpush2.msra.mxu0 0.0
  %208 = vmatprep.subr.mxu0 0.0
  %209 = vmatpush2.msra.mxu0 0.0
  %210 = vmatprep.subr.mxu0 0.0
  %211 = vmatpush2.msra.mxu0 0.0
  %212 = vmatprep.subr.mxu0 0.0
  %213 = vmatpush2.msra.mxu0 0.0
  %214 = vmatprep.subr.mxu0 0.0
  %215 = vmatpush2.msra.mxu0 0.0
  %216 = vmatprep.subr.mxu0 0.0
  %217 = vmatpush2.msra.mxu0 0.0
  %218 = vmatprep.subr.mxu0 0.0
  %219 = vmatpush2.msra.mxu0 0.0
  %220 = vmatprep.subr.mxu0 0.0
  %221 = vmatpush2.msra.mxu0 0.0
  %222 = vmatprep.subr.mxu0 0.0
  %223 = vmatpush2.msra.mxu0 0.0
  %224 = vmatprep.subr.mxu0 0.0
  %225 = vmatpush2.msra.mxu0 0.0
  %226 = vmatprep.subr.mxu0 0.0
  %227 = vmatpush2.msra.mxu0 0.0
  %228 = vmatprep.subr.mxu0 0.0
  %229 = vmatpush2.msra.mxu0 0.0
  %230 = vmatprep.mubr.f32.mxu0 0.0
  %231 = vmatmul.mubr.f32.gmra.mxu0 %v71
  %v232 = vpop.f32.mrf.mxu0
  %v233 = vadd.f32 %v62, %v232
  %v234 = vpop.f32.mrf.mxu0
  %v235 = vadd.f32 %v66, %v234
  %236 = vmatprep.mubr.f32.mxu0 0.0
  %237 = vmatmul.mubr.f32.gmra.mxu0 %v74
  %v238 = vpop.f32.mrf.mxu0
  %v239 = vadd.f32 %v62, %v238
  %v240 = vpop.f32.mrf.mxu0
  %v241 = vadd.f32 %v66, %v240
  %242 = vmatprep.mubr.f32.mxu0 0.0
  %243 = vmatmul.mubr.f32.gmra.mxu0 %v77
  %v244 = vpop.f32.mrf.mxu0
  %v245 = vadd.f32 %v62, %v244
  %v246 = vpop.f32.mrf.mxu0
  %v247 = vadd.f32 %v66, %v246
  %248 = vmatprep.mubr.f32.mxu0 0.0
  %249 = vmatmul.mubr.f32.gmra.mxu0 %v80
  %v250 = vpop.f32.mrf.mxu0
  %v251 = vadd.f32 %v62, %v250
  %v252 = vpop.f32.mrf.mxu0
  %v253 = vadd.f32 %v66, %v252
  %254 = vmatprep.mubr.f32.mxu0 0.0
  %255 = vmatmul.mubr.f32.gmra.mxu0 %v83
  %v256 = vpop.f32.mrf.mxu0
  %v257 = vadd.f32 %v62, %v256
  %v258 = vpop.f32.mrf.mxu0
  %v259 = vadd.f32 %v66, %v258
  %260 = vmatprep.mubr.f32.mxu0 0.0
  %261 = vmatmul.mubr.f32.gmra.mxu0 %v86
  %v262 = vpop.f32.mrf.mxu0
  %v263 = vadd.f32 %v62, %v262
  %v264 = vpop.f32.mrf.mxu0
  %v265 = vadd.f32 %v66, %v264
  %266 = vmatprep.mubr.f32.mxu0 0.0
  %267 = vmatmul.mubr.f32.gmra.mxu0 %v89
  %v268 = vpop.f32.mrf.mxu0
  %v269 = vadd.f32 %v62, %v268
  %v270 = vpop.f32.mrf.mxu0
  %v271 = vadd.f32 %v66, %v270
  %272 = vmatprep.mubr.f32.mxu0 0.0
  %273 = vmatmul.mubr.f32.gmra.mxu0 %v92
  %v274 = vpop.f32.mrf.mxu0
  %v275 = vadd.f32 %v62, %v274
  %v276 = vpop.f32.mrf.mxu0
  %v277 = vadd.f32 %v66, %v276
  %278 = vmatprep.mubr.f32.mxu0 0.0
  %279 = vmatmul.mubr.f32.gmra.mxu0 %v95
  %v280 = vpop.f32.mrf.mxu0
  %v281 = vadd.f32 %v62, %v280
  %v282 = vpop.f32.mrf.mxu0
  %v283 = vadd.f32 %v66, %v282
  %284 = vmatprep.mubr.f32.mxu0 0.0
  %285 = vmatmul.mubr.f32.gmra.mxu0 %v98
  %v286 = vpop.f32.mrf.mxu0
  %v287 = vadd.f32 %v62, %v286
  %v288 = vpop.f32.mrf.mxu0
  %v289 = vadd.f32 %v66, %v288
  %290 = vmatprep.mubr.f32.mxu0 0.0
  %291 = vmatmul.mubr.f32.gmra.mxu0 %v101
  %v292 = vpop.f32.mrf.mxu0
  %v293 = vadd.f32 %v62, %v292
  %v294 = vpop.f32.mrf.mxu0
  %v295 = vadd.f32 %v66, %v294
  %296 = vmatprep.mubr.f32.mxu0 0.0
  %297 = vmatmul.mubr.f32.gmra.mxu0 %v104
  %v298 = vpop.f32.mrf.mxu0
  %v299 = vadd.f32 %v62, %v298
  %v300 = vpop.f32.mrf.mxu0
  %v301 = vadd.f32 %v66, %v300
  %302 = vmatprep.mubr.f32.mxu0 0.0
  %303 = vmatmul.mubr.f32.gmra.mxu0 %v107
  %v304 = vpop.f32.mrf.mxu0
  %v305 = vadd.f32 %v62, %v304
  %v306 = vpop.f32.mrf.mxu0
  %v307 = vadd.f32 %v66, %v306
  %308 = vmatprep.mubr.f32.mxu0 0.0
  %309 = vmatmul.mubr.f32.gmra.mxu0 %v110
  %v310 = vpop.f32.mrf.mxu0
  %v311 = vadd.f32 %v62, %v310
  %v312 = vpop.f32.mrf.mxu0
  %v313 = vadd.f32 %v66, %v312
  %314 = vmatprep.mubr.f32.mxu0 0.0
  %315 = vmatmul.mubr.f32.gmra.mxu0 %v113
  %v316 = vpop.f32.mrf.mxu0
  %v317 = vadd.f32 %v62, %v316
  %v318 = vpop.f32.mrf.mxu0
  %v319 = vadd.f32 %v66, %v318
  %320 = vmatprep.mubr.f32.mxu0 0.0
  %321 = vmatmul.mubr.f32.gmra.mxu0 %v116
  %v322 = vpop.f32.mrf.mxu0
  %v323 = vadd.f32 %v62, %v322
  %v324 = vpop.f32.mrf.mxu0
  %v325 = vadd.f32 %v66, %v324
  %326 = vmatprep.mubr.f32.mxu0 0.0
  %327 = vmatmul.mubr.f32.gmra.mxu0 %v119
  %v328 = vpop.f32.mrf.mxu0
  %v329 = vadd.f32 %v62, %v328
  %v330 = vpop.f32.mrf.mxu0
  %331 = vmatprep.mubr.f32.mxu0 0.0
  %332 = vmatmul.mubr.f32.gmra.mxu0 %v122
  %v333 = vpop.f32.mrf.mxu0
  %v334 = vadd.f32 %v62, %v333
  %v335 = vpop.f32.mrf.mxu0
  %336 = vmatprep.mubr.f32.mxu0 0.0
  %337 = vmatmul.mubr.f32.gmra.mxu0 %v125
  %v338 = vpop.f32.mrf.mxu0
  %v339 = vadd.f32 %v62, %v338
  %v340 = vpop.f32.mrf.mxu0
  %341 = vmatprep.mubr.f32.mxu0 0.0
  %342 = vmatmul.mubr.f32.gmra.mxu0 %v128
  %v343 = vpop.f32.mrf.mxu0
  %v344 = vadd.f32 %v62, %v343
  %v345 = vpop.f32.mrf.mxu0
  %346 = vmatprep.mubr.f32.mxu0 0.0
  %347 = vmatmul.mubr.f32.gmra.mxu0 %v131
  %v348 = vpop.f32.mrf.mxu0
  %v349 = vadd.f32 %v62, %v348
  %v350 = vpop.f32.mrf.mxu0
  %351 = vmatprep.mubr.f32.mxu0 0.0
  %352 = vmatmul.mubr.f32.gmra.mxu0 %v134
  %v353 = vpop.f32.mrf.mxu0
  %v354 = vadd.f32 %v62, %v353
  %v355 = vpop.f32.mrf.mxu0
  %356 = vmatprep.mubr.f32.mxu0 0.0
  %357 = vmatmul.mubr.f32.gmra.mxu0 %v137
  %v358 = vpop.f32.mrf.mxu0
  %v359 = vadd.f32 %v62, %v358
  %v360 = vpop.f32.mrf.mxu0
  %361 = vmatprep.mubr.f32.mxu0 0.0
  %362 = vmatmul.mubr.f32.gmra.mxu0 %v140
  %v363 = vpop.f32.mrf.mxu0
  %v364 = vadd.f32 %v62, %v363
  %v365 = vpop.f32.mrf.mxu0
  %366 = vmatprep.mubr.f32.mxu0 0.0
  %367 = vmatmul.mubr.f32.gmra.mxu0 %v143
  %v368 = vpop.f32.mrf.mxu0
  %v369 = vadd.f32 %v62, %v368
  %v370 = vpop.f32.mrf.mxu0
  %371 = vmatprep.mubr.f32.mxu0 0.0
  %372 = vmatmul.mubr.f32.gmra.mxu0 %v146
  %v373 = vpop.f32.mrf.mxu0
  %v374 = vadd.f32 %v62, %v373
  %v375 = vpop.f32.mrf.mxu0
  %376 = vmatprep.mubr.f32.mxu0 0.0
  %377 = vmatmul.mubr.f32.gmra.mxu0 %v149
  %v378 = vpop.f32.mrf.mxu0
  %v379 = vadd.f32 %v62, %v378
  %v380 = vpop.f32.mrf.mxu0
  %381 = vmatprep.mubr.f32.mxu0 0.0
  %382 = vmatmul.mubr.f32.gmra.mxu0 %v152
  %v383 = vpop.f32.mrf.mxu0
  %v384 = vadd.f32 %v62, %v383
  %v385 = vpop.f32.mrf.mxu0
  %386 = vmatprep.mubr.f32.mxu0 0.0
  %387 = vmatmul.mubr.f32.gmra.mxu0 %v155
  %v388 = vpop.f32.mrf.mxu0
  %v389 = vadd.f32 %v62, %v388
  %v390 = vpop.f32.mrf.mxu0
  %391 = vmatprep.mubr.f32.mxu0 0.0
  %392 = vmatmul.mubr.f32.gmra.mxu0 %v158
  %v393 = vpop.f32.mrf.mxu0
  %v394 = vadd.f32 %v62, %v393
  %v395 = vpop.f32.mrf.mxu0
  %396 = vmatprep.mubr.f32.mxu0 0.0
  %397 = vmatmul.mubr.f32.gmra.mxu0 %v161
  %v398 = vpop.f32.mrf.mxu0
  %v399 = vadd.f32 %v62, %v398
  %v400 = vpop.f32.mrf.mxu0
  %401 = vmatprep.mubr.f32.mxu0 0.0
  %402 = vmatmul.mubr.f32.gmra.mxu0 %v164
  %v403 = vpop.f32.mrf.mxu0
  %v404 = vadd.f32 %v62, %v403
  %v405 = vpop.f32.mrf.mxu0
  %406 = vdwg.mxu0
  %v407 = vsub.f32 %v233, %v329
  %v408 = vsub.f32 %v239, %v334
  %v409 = vsub.f32 %v245, %v339
  %v410 = vsub.f32 %v251, %v344
  %v411 = vsub.f32 %v257, %v349
  %v412 = vsub.f32 %v263, %v354
  %v413 = vsub.f32 %v269, %v359
  %v414 = vsub.f32 %v275, %v364
  %v415 = vsub.f32 %v281, %v369
  %v416 = vsub.f32 %v287, %v374
  %v417 = vsub.f32 %v293, %v379
  %v418 = vsub.f32 %v299, %v384
  %v419 = vsub.f32 %v305, %v389
  %v420 = vsub.f32 %v311, %v394
  %v421 = vsub.f32 %v317, %v399
  %v422 = vsub.f32 %v323, %v404
  %v423 = vmul.f32 %v407, %v407
  %v424 = vmul.f32 %v408, %v408
  %v425 = vmul.f32 %v409, %v409
  %v426 = vmul.f32 %v410, %v410
  %v427 = vmul.f32 %v411, %v411
  %v428 = vmul.f32 %v412, %v412
  %v429 = vmul.f32 %v413, %v413
  %v430 = vmul.f32 %v414, %v414
  %v431 = vmul.f32 %v415, %v415
  %v432 = vmul.f32 %v416, %v416
  %v433 = vmul.f32 %v417, %v417
  %v434 = vmul.f32 %v418, %v418
  %v435 = vmul.f32 %v419, %v419
  %v436 = vmul.f32 %v420, %v420
  %v437 = vmul.f32 %v421, %v421
  %v438 = vmul.f32 %v422, %v422
  %v439 = vadd.f32 %v423, %v424
  %v440 = vadd.f32 %v439, %v425
  %v441 = vadd.f32 %v440, %v426
  %v442 = vadd.f32 %v441, %v427
  %v443 = vadd.f32 %v442, %v428
  %v444 = vadd.f32 %v443, %v429
  %v445 = vadd.f32 %v444, %v430
  %v446 = vadd.f32 %v445, %v431
  %v447 = vadd.f32 %v446, %v432
  %v448 = vadd.f32 %v447, %v433
  %v449 = vadd.f32 %v448, %v434
  %v450 = vadd.f32 %v449, %v435
  %v451 = vadd.f32 %v450, %v436
  %v452 = vadd.f32 %v451, %v437
  %v453 = vadd.f32 %v452, %v438
  %454 = vadd.xlane.f32.xlu0 %v453
  %v455 = vpop.xlane.xlu0 %454
  %v456 = vrot.slane %v455, 4
  %v457 = vadd.f32 %v455, %v456
  %v458 = vrot.slane %v457, 2
  %v459 = vadd.f32 %v457, %v458
  %v460 = vrot.slane %v459, 1
  %v461 = vadd.f32 %v459, %v460
  %s462 = vtos %v461
  %v463 = vld [vmem:[%s3] sm:$0xff]
  %v464 = vld [vmem:[%s3 + $0x8] sm:$0xff]
  %v465 = vld [vmem:[%s3 + $0x10] sm:$0xff]
  %v466 = vld [vmem:[%s3 + $0x18] sm:$0xff]
  %v467 = vld [vmem:[%s3 + $0x20] sm:$0xff]
  %v468 = vld [vmem:[%s3 + $0x28] sm:$0xff]
  %v469 = vld [vmem:[%s3 + $0x30] sm:$0xff]
  %v470 = vld [vmem:[%s3 + $0x38] sm:$0xff]
  %v471 = vld [vmem:[%s3 + $0x40] sm:$0xff]
  %v472 = vld [vmem:[%s3 + $0x48] sm:$0xff]
  %v473 = vld [vmem:[%s3 + $0x50] sm:$0xff]
  %v474 = vld [vmem:[%s3 + $0x58] sm:$0xff]
  %v475 = vld [vmem:[%s3 + $0x60] sm:$0xff]
  %v476 = vld [vmem:[%s3 + $0x68] sm:$0xff]
  %v477 = vld [vmem:[%s3 + $0x70] sm:$0xff]
  %v478 = vld [vmem:[%s3 + $0x78] sm:$0xff]
  %v479 = vsub.f32 %v235, %v463
  %v480 = vsub.f32 %v241, %v464
  %v481 = vsub.f32 %v247, %v465
  %v482 = vsub.f32 %v253, %v466
  %v483 = vsub.f32 %v259, %v467
  %v484 = vsub.f32 %v265, %v468
  %v485 = vsub.f32 %v271, %v469
  %v486 = vsub.f32 %v277, %v470
  %v487 = vsub.f32 %v283, %v471
  %v488 = vsub.f32 %v289, %v472
  %v489 = vsub.f32 %v295, %v473
  %v490 = vsub.f32 %v301, %v474
  %v491 = vsub.f32 %v307, %v475
  %v492 = vsub.f32 %v313, %v476
  %v493 = vsub.f32 %v319, %v477
  %v494 = vsub.f32 %v325, %v478
  %v495 = vmul.f32 %v479, %v479
  %v496 = vmul.f32 %v480, %v480
  %v497 = vmul.f32 %v481, %v481
  %v498 = vmul.f32 %v482, %v482
  %v499 = vmul.f32 %v483, %v483
  %v500 = vmul.f32 %v484, %v484
  %v501 = vmul.f32 %v485, %v485
  %v502 = vmul.f32 %v486, %v486
  %v503 = vmul.f32 %v487, %v487
  %v504 = vmul.f32 %v488, %v488
  %v505 = vmul.f32 %v489, %v489
  %v506 = vmul.f32 %v490, %v490
  %v507 = vmul.f32 %v491, %v491
  %v508 = vmul.f32 %v492, %v492
  %v509 = vmul.f32 %v493, %v493
  %v510 = vmul.f32 %v494, %v494
  %v511 = vadd.f32 %v495, %v496
  %v512 = vadd.f32 %v511, %v497
  %v513 = vadd.f32 %v512, %v498
  %v514 = vadd.f32 %v513, %v499
  %v515 = vadd.f32 %v514, %v500
  %v516 = vadd.f32 %v515, %v501
  %v517 = vadd.f32 %v516, %v502
  %v518 = vadd.f32 %v517, %v503
  %v519 = vadd.f32 %v518, %v504
  %v520 = vadd.f32 %v519, %v505
  %v521 = vadd.f32 %v520, %v506
  %v522 = vadd.f32 %v521, %v507
  %v523 = vadd.f32 %v522, %v508
  %v524 = vadd.f32 %v523, %v509
  %v525 = vadd.f32 %v524, %v510
  %526 = vadd.xlane.f32.xlu0 %v525
  %v527 = vpop.xlane.xlu0 %526
  %v528 = vrot.slane %v527, 4
  %v529 = vadd.f32 %v527, %v528
  %v530 = vrot.slane %v529, 2
  %v531 = vadd.f32 %v529, %v530
  %v532 = vrot.slane %v531, 1
  %v533 = vadd.f32 %v531, %v532
  %s534 = vtos %v533
  %s535 = smul.f32 %s534, 0.001953125
  %v536 = vlaneseq
  %v537 = vand.u32 %v536, 127
  %vm538 = vcmp.eq.s32.totalorder %v537, 0
  %v539 = vstv %s462
  %v540 = vstv %s535
  %v541 = vsel %vm538, %v539, %v540
  %vm542 = vcmask 8192
  %543 = vst.msk [vmem:[%s4] sm:$0x1] %vm542, %v541
  // Predicated region
  $region18: #{fused_losses.1} parent=0 // pred_check
    _
  $region19: #{fused_losses.1} parent=0 // pred_check_branch
    %545 = sbr.rel (0) target = $region21
  $region20: #{fused_losses.1} parent=0 // pred_region
    _
  $region21: #{fused_losses.1} parent=0 // pred_fallthru
    _
  // Predicated region
  $region22: #{fused_losses.1} parent=0 // pred_check
    _
  $region23: #{fused_losses.1} parent=0 // pred_check_branch
    %547 = sbr.rel (0) target = $region25
  $region24: #{fused_losses.1} parent=0 // pred_region
    _
  $region25: #{fused_losses.1} parent=0 // pred_fallthru
    _

</llo_original>
